<compile_context>
chip_gen: v5e
topology: v5e:2x2
jax: 0.10.0
libtpu: 0.0.40
codegen_flags: <defaults>
</compile_context>

<pallas_src>
import jax
import jax.numpy as jnp
from jax.experimental import pallas as pl
from jax.experimental.pallas import tpu as pltpu


def _mlp_kernel(x_ref, w1_ref, b1_ref, w2_ref, b2_ref, o_ref):
    # x_ref : (tile, D)  f32   batch rows on the sublane axis
    # w1_ref: (D, H)     f32   resident across the grid
    # b1_ref: (1, H)     f32
    # w2_ref: (H, O)     f32   resident across the grid
    # b2_ref: (1, O)     f32
    # o_ref : (tile, O)  f32   written directly in final [B, O] layout
    h = jnp.dot(x_ref[...], w1_ref[...], preferred_element_type=jnp.float32)
    h = jnp.maximum(h + b1_ref[...], 0.0)                      # ReLU (f32)
    y = jnp.dot(h, w2_ref[...], preferred_element_type=jnp.float32) + b2_ref[...]
    o_ref[...] = y.astype(o_ref.dtype)


def state_encoder_forward(state, w1_t, b1, w2_t, b2, *, block_b=2048):
    """Fused 2-layer MLP:  relu(state @ w1_t + b1) @ w2_t + b2.

    state: [B, D] float32
    w1_t : [D, H]   (pre-transposed once at init)
    b1   : [1, H]
    w2_t : [H, O]
    b2   : [1, O]
    Returns [B, O] in state.dtype.
    """
    B, D = state.shape
    D2, H = w1_t.shape
    H2, O = w2_t.shape
    assert D2 == D and H2 == H
    assert b1.shape == (1, H) and b2.shape == (1, O)

    # Batch tiling: single program for small/medium batches (tile == B, no
    # masked tail); otherwise 2048-row tiles (multiple of 8 sublanes) with the
    # ragged last block masked implicitly by Pallas.  Per-step activation
    # traffic at tile=2048 is tile*(D+O)*4 bytes -- well under scoped VMEM
    # even double-buffered on v5e/v6e/v7x.
    if B <= block_b:
        tile = B
    else:
        tile = block_b
    grid = (pl.cdiv(B, tile),)

    cost = pl.CostEstimate(
        flops=2 * B * (D * H + H * O),
        transcendentals=0,
        bytes_accessed=(B * D * 4 + B * O * 4                      # activations
                        + (w1_t.size + w2_t.size + b1.size + b2.size) * 4),
    )

    return pl.pallas_call(
        _mlp_kernel,
        out_shape=jax.ShapeDtypeStruct((B, O), state.dtype),
        grid_spec=pl.GridSpec(
            grid=grid,
            in_specs=[
                pl.BlockSpec((tile, D), lambda i: (i, 0)),  # state tile
                pl.BlockSpec((D, H), lambda i: (0, 0)),     # W1^T (resident)
                pl.BlockSpec((1, H), lambda i: (0, 0)),     # b1
                pl.BlockSpec((H, O), lambda i: (0, 0)),     # W2^T (resident)
                pl.BlockSpec((1, O), lambda i: (0, 0)),     # b2
            ],
            out_specs=pl.BlockSpec((tile, O), lambda i: (i, 0)),
        ),
        compiler_params=pltpu.CompilerParams(
            dimension_semantics=("parallel",)),              # megacore on v7x
        cost_estimate=cost,
    )(state, w1_t, b1, w2_t, b2)


class StateEncoderPallas:
    """JAX/Pallas port of StateEncoder with state_mlp_size=(64, 64)."""

    def __init__(self, observation_space, state_mlp_size=(64, 64), key=None):
        self.state_key = "full_state"
        self.state_shape = observation_space[self.state_key]
        if len(state_mlp_size) == 0:
            raise RuntimeError("State mlp size is empty")
        elif len(state_mlp_size) == 1:
            net_arch = []
        else:
            net_arch = list(state_mlp_size[:-1])
        # TODO(synk): only the default 2-layer MLP (one hidden layer) is fused;
        # other state_mlp_size configurations are not implemented here.
        assert len(net_arch) == 1, "kernel implements the default 2-layer MLP"
        D = self.state_shape[0]
        H = net_arch[0]
        O = state_mlp_size[-1]
        self.output_dim = O

        key = jax.random.PRNGKey(0) if key is None else key
        k1, k2, k3, k4 = jax.random.split(key, 4)
        # Deterministic synthetic init (PyTorch-like uniform(-1/sqrt(fan_in), +)),
        # stored in PyTorch (out, in) layout for reference checking.
        s1 = 1.0 / jnp.sqrt(D)
        s2 = 1.0 / jnp.sqrt(H)
        self.w1 = jax.random.uniform(k1, (H, D), jnp.float32, -s1, s1)
        self.b1 = jax.random.uniform(k2, (H,), jnp.float32, -s1, s1)
        self.w2 = jax.random.uniform(k3, (O, H), jnp.float32, -s2, s2)
        self.b2 = jax.random.uniform(k4, (O,), jnp.float32, -s2, s2)

        # Kernel-friendly layouts, computed exactly once at init (no per-forward
        # layout / cast / pad work in the wrapper).
        self.w1_t = jnp.asarray(self.w1.T)            # (D, H)
        self.w2_t = jnp.asarray(self.w2.T)            # (H, O)
        self.b1_r = jnp.asarray(self.b1.reshape(1, H))
        self.b2_r = jnp.asarray(self.b2.reshape(1, O))

    def output_shape(self):
        return self.output_dim

    def __call__(self, observations):
        state = observations[self.state_key]
        return state_encoder_forward(state, self.w1_t, self.b1_r,
                                     self.w2_t, self.b2_r)


if __name__ == "__main__":
    # Small shapes: batch=8, state_dim=32, hidden=64, out=64.
    B, D = 8, 32
    observation_space = {"full_state": (D,)}
    enc = StateEncoderPallas(observation_space, state_mlp_size=(64, 64))

    key = jax.random.PRNGKey(0)
    state = jax.random.normal(key, (B, D), dtype=jnp.float32)
    obs = {"full_state": state}

    out = jax.block_until_ready(enc(obs))

    # Pure-JAX f32 reference (exact PyTorch semantics).
    ref = jnp.maximum(state @ enc.w1.T + enc.b1[None, :], 0.0) @ enc.w2.T + enc.b2[None, :]

    assert out.shape == (B, enc.output_dim)
    assert bool(jnp.all(jnp.isfinite(out)))
    # Tolerance covers the MXU's internal matmul precision for f32 operands.
    assert jnp.allclose(out, ref, atol=2e-2, rtol=2e-2)

    print("KERNEL_OK")
</pallas_src>

<mosaic_0001>
module attributes {stable_mosaic.version = 11 : i64} {
  func.func @_mlp_kernel(%arg0: i32, %arg1: memref<8x32xf32, #tpu.memory_space<vmem>>, %arg2: memref<32x64xf32, #tpu.memory_space<vmem>>, %arg3: memref<1x64xf32, #tpu.memory_space<vmem>>, %arg4: memref<64x64xf32, #tpu.memory_space<vmem>>, %arg5: memref<1x64xf32, #tpu.memory_space<vmem>>, %arg6: memref<8x64xf32, #tpu.memory_space<vmem>>) attributes {dimension_semantics = [#tpu.dimension_semantics<parallel>], iteration_bounds = array<i64: 1>, scalar_prefetch = 0 : i64, scratch_operands = 0 : i64, tpu.core_type = #tpu.core_type<tc>, window_params = [{transform_indices = @transform_0, window_bounds = array<i64: 8, 32>}, {pipeline_mode = #tpu.pipeline_mode<synchronous>, transform_indices = @transform_1, window_bounds = array<i64: 32, 64>}, {pipeline_mode = #tpu.pipeline_mode<synchronous>, transform_indices = @transform_2, window_bounds = array<i64: 1, 64>}, {pipeline_mode = #tpu.pipeline_mode<synchronous>, transform_indices = @transform_3, window_bounds = array<i64: 64, 64>}, {pipeline_mode = #tpu.pipeline_mode<synchronous>, transform_indices = @transform_4, window_bounds = array<i64: 1, 64>}, {transform_indices = @transform_5, window_bounds = array<i64: 8, 64>}]} {
    %c0 = arith.constant 0 : index
    %c0_0 = arith.constant 0 : index
    %0 = vector.load %arg1[%c0, %c0_0] : memref<8x32xf32, #tpu.memory_space<vmem>>, vector<8x32xf32>
    %c0_1 = arith.constant 0 : index
    %c0_2 = arith.constant 0 : index
    %1 = vector.load %arg2[%c0_1, %c0_2] : memref<32x64xf32, #tpu.memory_space<vmem>>, vector<32x64xf32>
    %cst = arith.constant dense<0.000000e+00> : vector<8x64xf32>
    %2 = tpu.matmul %0, %1, %cst {dimension_numbers = #tpu.dot_dimension_numbers<[1], [0], [0], [1], [0, 0, 1, 1], [], []>} : vector<8x32xf32>, vector<32x64xf32>, vector<8x64xf32> -> vector<8x64xf32>
    %c0_3 = arith.constant 0 : index
    %c0_4 = arith.constant 0 : index
    %3 = vector.load %arg3[%c0_3, %c0_4] : memref<1x64xf32, #tpu.memory_space<vmem>>, vector<1x64xf32>
    %4 = vector.broadcast %3 : vector<1x64xf32> to vector<8x64xf32>
    %5 = arith.addf %2, %4 : vector<8x64xf32>
    %cst_5 = arith.constant 0.000000e+00 : f32
    %6 = vector.broadcast %cst_5 : f32 to vector<8x64xf32>
    %7 = arith.maximumf %5, %6 : vector<8x64xf32>
    %c0_6 = arith.constant 0 : index
    %c0_7 = arith.constant 0 : index
    %8 = vector.load %arg4[%c0_6, %c0_7] : memref<64x64xf32, #tpu.memory_space<vmem>>, vector<64x64xf32>
    %cst_8 = arith.constant dense<0.000000e+00> : vector<8x64xf32>
    %9 = tpu.matmul %7, %8, %cst_8 {dimension_numbers = #tpu.dot_dimension_numbers<[1], [0], [0], [1], [0, 0, 1, 1], [], []>} : vector<8x64xf32>, vector<64x64xf32>, vector<8x64xf32> -> vector<8x64xf32>
    %c0_9 = arith.constant 0 : index
    %c0_10 = arith.constant 0 : index
    %10 = vector.load %arg5[%c0_9, %c0_10] : memref<1x64xf32, #tpu.memory_space<vmem>>, vector<1x64xf32>
    %11 = vector.broadcast %10 : vector<1x64xf32> to vector<8x64xf32>
    %12 = arith.addf %9, %11 : vector<8x64xf32>
    %c0_11 = arith.constant 0 : index
    %c0_12 = arith.constant 0 : index
    %13 = vector.load %arg6[%c0_11, %c0_12] : memref<8x64xf32, #tpu.memory_space<vmem>>, vector<8x64xf32>
    tpu.vector_store %arg6[%c0_11, %c0_12], %12 {strides = array<i32>} : memref<8x64xf32, #tpu.memory_space<vmem>>, vector<8x64xf32>,
    return
  }
  func.func @transform_0(%arg0: i32) -> (i32, i32) {
    %c0_i32 = arith.constant 0 : i32
    %c0_i32_0 = arith.constant 0 : i32
    return %arg0, %c0_i32 : i32, i32
  }
  func.func @transform_1(%arg0: i32) -> (i32, i32) {
    %c0_i32 = arith.constant 0 : i32
    %c0_i32_0 = arith.constant 0 : i32
    %c0_i32_1 = arith.constant 0 : i32
    return %c0_i32, %c0_i32_0 : i32, i32
  }
  func.func @transform_2(%arg0: i32) -> (i32, i32) {
    %c0_i32 = arith.constant 0 : i32
    %c0_i32_0 = arith.constant 0 : i32
    %c0_i32_1 = arith.constant 0 : i32
    return %c0_i32, %c0_i32_0 : i32, i32
  }
  func.func @transform_3(%arg0: i32) -> (i32, i32) {
    %c0_i32 = arith.constant 0 : i32
    %c0_i32_0 = arith.constant 0 : i32
    %c0_i32_1 = arith.constant 0 : i32
    return %c0_i32, %c0_i32_0 : i32, i32
  }
  func.func @transform_4(%arg0: i32) -> (i32, i32) {
    %c0_i32 = arith.constant 0 : i32
    %c0_i32_0 = arith.constant 0 : i32
    %c0_i32_1 = arith.constant 0 : i32
    return %c0_i32, %c0_i32_0 : i32, i32
  }
  func.func @transform_5(%arg0: i32) -> (i32, i32) {
    %c0_i32 = arith.constant 0 : i32
    %c0_i32_0 = arith.constant 0 : i32
    return %arg0, %c0_i32 : i32, i32
  }
}

</mosaic_0001>

<llo_original>
// kernel: tpu_custom_call.1
$region0: #{tpu_custom_call.1}
  #allocation0 [shape = 'u32[]', space=smem, size = 0x4, offset = 0x4, fixed_abs, tag = 'smem constant byte address 0x4 - core index']
  #allocation1 [shape = 'u32[72,128]{1,0:T(1,128)}', space=vmem, size = 0x9000, scoped, tag = 'internal scratch']
  %s0 = inlined_call_operand.hbm [shape: f32[8,32], index: 0, kind: input, shape index: {}]
  %s1 = inlined_call_operand.hbm [shape: f32[32,64], index: 1, kind: input, shape index: {}]
  %s2 = inlined_call_operand.vmem [shape: f32[1,64], index: 2, kind: input, shape index: {}]
  %s3 = inlined_call_operand.hbm [shape: f32[64,64], index: 3, kind: input, shape index: {}]
  %s4 = inlined_call_operand.vmem [shape: f32[1,64], index: 4, kind: input, shape index: {}]
  %s5 = inlined_call_operand.hbm [shape: f32[8,64], index: 5, kind: output, shape index: {}]
  %s6 = sld [smem:[#allocation0]]
  $region42: #{tpu_custom_call.1} parent=0
    _
  %s8 = ssub.s32 1, %s6
  %s9 = scalar_select 0, %s8, %s6
  $region1: #{tpu_custom_call.1} parent=0
    #allocation2 [shape = 'u8[4096]{0}', space=vmem, size = 0x1000, scoped, tag = 'input window, operand 0, single buffered']
    #allocation3 [shape = 's32[1]{0}', space=sflag, size = 0x4, scoped, tag = 'scoped memory for tpu_custom_call.1']
    #allocation4 [shape = 's32[1]{0}', space=sflag, size = 0x4, scoped, tag = 'scoped memory for tpu_custom_call.1']
    #allocation5 [shape = 'u8[16384]{0}', space=vmem, size = 0x4000, scoped, tag = 'input window, operand 1, single buffered']
    #allocation6 [shape = 's32[1]{0}', space=sflag, size = 0x4, scoped, tag = 'scoped memory for tpu_custom_call.1']
    #allocation7 [shape = 'u8[32768]{0}', space=vmem, size = 0x8000, scoped, tag = 'input window, operand 3, single buffered']
    #allocation8 [shape = 'u8[4096]{0}', space=vmem, size = 0x1000, scoped, tag = 'output window, operand 0, single buffered']
    %10 = vsyncpa [#allocation3], 0
    %11 = vsyncpa [#allocation6], 0
    %12 = vsyncpa [#allocation4], 0
    // Predicated region
    $region2: #{tpu_custom_call.1} parent=1 // pred_check
      _
    $region3: #{tpu_custom_call.1} parent=1 // pred_check_branch
      %14 = sbr.rel (0) target = $region5
    $region4: #{tpu_custom_call.1} parent=1 // pred_region
      %16 = vsyncadd [#allocation3], 0
      %s18 = sshll.u32 %s0, 4
      %s19 = int_to_ptr.hbm [resolvable:$true] %s18
      %s20 = sshll.u32 [#allocation2], 4
      %s21 = int_to_ptr.vmem [resolvable:$true] %s20
      %23 = dma.hbm_to_vmem [thread:$0]  %s19, 128, %s21, [#allocation3]
    $region5: #{tpu_custom_call.1} parent=1 // pred_fallthru
      _
    // Predicated region
    $region6: #{tpu_custom_call.1} parent=1 // pred_check
      _
    $region7: #{tpu_custom_call.1} parent=1 // pred_check_branch
      %25 = sbr.rel (0) target = $region9
    $region8: #{tpu_custom_call.1} parent=1 // pred_region
      %27 = vsyncadd [#allocation6], 0
      %s28 = sshll.u32 %s1, 4
      %s29 = int_to_ptr.hbm [resolvable:$true] %s28
      %s30 = sshll.u32 [#allocation5], 4
      %s31 = int_to_ptr.vmem [resolvable:$true] %s30
      %36 = dma.hbm_to_vmem [thread:$0]  %s29, 512, %s31, [#allocation6], 128, 128, 8
    $region9: #{tpu_custom_call.1} parent=1 // pred_fallthru
      _
    // Predicated region
    $region10: #{tpu_custom_call.1} parent=1 // pred_check
      _
    $region11: #{tpu_custom_call.1} parent=1 // pred_check_branch
      %38 = sbr.rel (0) target = $region13
    $region12: #{tpu_custom_call.1} parent=1 // pred_region
      _
    $region13: #{tpu_custom_call.1} parent=1 // pred_fallthru
      _
    // Predicated region
    $region14: #{tpu_custom_call.1} parent=1 // pred_check
      _
    $region15: #{tpu_custom_call.1} parent=1 // pred_check_branch
      %40 = sbr.rel (0) target = $region17
    $region16: #{tpu_custom_call.1} parent=1 // pred_region
      %42 = vsyncadd [#allocation6], 0
      %s43 = sshll.u32 %s3, 4
      %s44 = int_to_ptr.hbm [resolvable:$true] %s43
      %s45 = sshll.u32 [#allocation7], 4
      %s46 = int_to_ptr.vmem [resolvable:$true] %s45
      %51 = dma.hbm_to_vmem [thread:$0]  %s44, 1024, %s46, [#allocation6], 128, 128, 8
    $region17: #{tpu_custom_call.1} parent=1 // pred_fallthru
      _
    // Predicated region
    $region18: #{tpu_custom_call.1} parent=1 // pred_check
      _
    $region19: #{tpu_custom_call.1} parent=1 // pred_check_branch
      %53 = sbr.rel (0) target = $region21
    $region20: #{tpu_custom_call.1} parent=1 // pred_region
      _
    $region21: #{tpu_custom_call.1} parent=1 // pred_fallthru
      _
    // Predicated region
    $region22: #{tpu_custom_call.1} parent=1 // pred_check
      _
    $region23: #{tpu_custom_call.1} parent=1 // pred_check_branch
      %55 = sbr.rel (0) target = $region25
    $region24: #{tpu_custom_call.1} parent=1 // pred_region
      %57 = dma.done [#allocation3], 128
    $region25: #{tpu_custom_call.1} parent=1 // pred_fallthru
      _
    // Predicated region
    $region26: #{tpu_custom_call.1} parent=1 // pred_check
      _
    $region27: #{tpu_custom_call.1} parent=1 // pred_check_branch
      %59 = sbr.rel (0) target = $region29
    $region28: #{tpu_custom_call.1} parent=1 // pred_region
      %61 = dma.done [#allocation6], 512
    $region29: #{tpu_custom_call.1} parent=1 // pred_fallthru
      _
    // Predicated region
    $region30: #{tpu_custom_call.1} parent=1 // pred_check
      _
    $region31: #{tpu_custom_call.1} parent=1 // pred_check_branch
      %63 = sbr.rel (0) target = $region33
    $region32: #{tpu_custom_call.1} parent=1 // pred_region
      %65 = dma.done [#allocation6], 1024
    $region33: #{tpu_custom_call.1} parent=1 // pred_fallthru
      _
    %v66 = vld [vmem:[#allocation2] sm:$0xff]
    %v67 = vld [vmem:[#allocation5] sm:$0xff]
    %v68 = vld [vmem:[#allocation5 + $0x8] sm:$0xff]
    %v69 = vld [vmem:[#allocation5 + $0x10] sm:$0xff]
    %v70 = vld [vmem:[#allocation5 + $0x18] sm:$0xff]
    %v71 = vld [vmem:[%s2] sm:$0x1]
    %v73 = vperm.slane %v71, 0
    %vm75 = vcmask 261120
    %v77 = vsel %vm75, %v66, 0
    %79 = vmatpush.msra.mxu0 0.0
    %80 = vmatpush.msra.mxu0 0.0
    %81 = vmatpush.msra.mxu0 0.0
    %82 = vmatpush.msra.mxu0 0.0
    %83 = vmatpush.msra.mxu0 0.0
    %84 = vmatpush.msra.mxu0 0.0
    %85 = vmatpush.msra.mxu0 0.0
    %86 = vmatpush.msra.mxu0 0.0
    %87 = vmatpush.msra.mxu0 0.0
    %88 = vmatpush.msra.mxu0 0.0
    %89 = vmatpush.msra.mxu0 0.0
    %90 = vmatpush.msra.mxu0 0.0
    %91 = vmatpush.msra.mxu0 %v70
    %92 = vmatpush.msra.mxu0 %v69
    %93 = vmatpush.msra.mxu0 %v68
    %94 = vmatpush.msra.mxu0 %v67
    %95 = vmatmul.f32.gmra.mxu0 %v77
    %v96 = vpop.f32.mrf.mxu0
    %v97 = vadd.f32 %v73, %v96
    %98 = vdwg.mxu0
    %v99 = vmax.f32 %v97, 0.0
    %v100 = vld [vmem:[#allocation7] sm:$0xff]
    %v101 = vld [vmem:[#allocation7 + $0x8] sm:$0xff]
    %v102 = vld [vmem:[#allocation7 + $0x10] sm:$0xff]
    %v103 = vld [vmem:[#allocation7 + $0x18] sm:$0xff]
    %v104 = vld [vmem:[#allocation7 + $0x20] sm:$0xff]
    %v105 = vld [vmem:[#allocation7 + $0x28] sm:$0xff]
    %v106 = vld [vmem:[#allocation7 + $0x30] sm:$0xff]
    %v107 = vld [vmem:[#allocation7 + $0x38] sm:$0xff]
    %v108 = vld [vmem:[%s4] sm:$0x1]
    %v110 = vperm.slane %v108, 0
    %vm112 = vcmask 523264
    %v114 = vsel %vm112, %v99, 0
    %116 = vmatpush.msra.mxu0 0.0
    %117 = vmatpush.msra.mxu0 0.0
    %118 = vmatpush.msra.mxu0 0.0
    %119 = vmatpush.msra.mxu0 0.0
    %120 = vmatpush.msra.mxu0 0.0
    %121 = vmatpush.msra.mxu0 0.0
    %122 = vmatpush.msra.mxu0 0.0
    %123 = vmatpush.msra.mxu0 0.0
    %124 = vmatpush.msra.mxu0 %v107
    %125 = vmatpush.msra.mxu0 %v106
    %126 = vmatpush.msra.mxu0 %v105
    %127 = vmatpush.msra.mxu0 %v104
    %128 = vmatpush.msra.mxu0 %v103
    %129 = vmatpush.msra.mxu0 %v102
    %130 = vmatpush.msra.mxu0 %v101
    %131 = vmatpush.msra.mxu0 %v100
    %132 = vmatmul.f32.gmra.mxu0 %v114
    %v133 = vpop.f32.mrf.mxu0
    %v134 = vadd.f32 %v110, %v133
    %135 = vdwg.mxu0
    %136 = vst.msk [vmem:[#allocation8] sm:$0xff] %vm112, %v134
    // Predicated region
    $region34: #{tpu_custom_call.1} parent=1 // pred_check
      _
    $region35: #{tpu_custom_call.1} parent=1 // pred_check_branch
      %138 = sbr.rel (0) target = $region37
    $region36: #{tpu_custom_call.1} parent=1 // pred_region
      %140 = vsyncadd [#allocation4], 0
      %s142 = sshll.u32 [#allocation8], 4
      %s143 = int_to_ptr.vmem [resolvable:$true] %s142
      %s144 = sshll.u32 %s5, 4
      %s145 = int_to_ptr.hbm [resolvable:$true] %s144
      %147 = dma.vmem_to_hbm [thread:$0]  %s143, 128, %s145, [#allocation4]
    $region37: #{tpu_custom_call.1} parent=1 // pred_fallthru
      _
    // Predicated region
    $region38: #{tpu_custom_call.1} parent=1 // pred_check
      _
    $region39: #{tpu_custom_call.1} parent=1 // pred_check_branch
      %149 = sbr.rel (0) target = $region41
    $region40: #{tpu_custom_call.1} parent=1 // pred_region
      %151 = dma.done [#allocation4], 128
    $region41: #{tpu_custom_call.1} parent=1 // pred_fallthru
      _
    %152 = vsyncpa [#allocation3], 1
    %153 = vsyncpa [#allocation6], 1
    %154 = vsyncpa [#allocation4], 1

</llo_original>
